<compile_context>
chip_gen: v7x
topology: tpu7x:2x2x1
jax: 0.10.0
libtpu: 0.0.40
codegen_flags: <defaults>
</compile_context>

<pallas_src>
import functools

import jax
import jax.numpy as jnp
from jax.experimental import pallas as pl
from jax.experimental.pallas import tpu as pltpu


def _round_up(x, m):
    return ((x + m - 1) // m) * m


def _sublane_tile(dtype):
    """Sublane packing factor for a dtype (8 for f32, 16 for bf16, 32 for i8)."""
    return max(8, 32 // max(1, jnp.dtype(dtype).itemsize))


def _vmem_block_budget_bytes():
    """Target bytes for double-buffered input blocks + in-kernel temporaries."""
    try:
        cap = int(pltpu.get_tpu_info().vmem_capacity_bytes)
    except Exception:
        cap = 64 * 1024 * 1024          # assume the smallest generation (v7x per-TC)
    return max(8 << 20, min(cap // 3, 28 << 20))


def _plan(N, C, L, x_dtype, m_dtype, budget):
    """Choose (layout kind, b_tile, l_tile, est. VMEM footprint)."""
    it = jnp.dtype(x_dtype).itemsize
    m_it = jnp.dtype(m_dtype).itemsize if m_dtype is not None else 0
    sub_x = _sublane_tile(x_dtype)
    sub_m = _sublane_tile(m_dtype) if m_dtype is not None else 8
    n8 = _round_up(max(N, 1), 8)

    if N <= 8:
        b_candidates = [N]
    else:
        # keep >= 2 blocks along the "parallel" batch axis (v7x megacore)
        b_hi = max(8, ((n8 // 2) // 8) * 8)
        b_candidates = list(range(b_hi, 0, -8))

    # ---- DENSE: whole sample's C*L on the lane axis, 2-D blocks ----
    if L % 128 == 0:
        def dense_bytes(b):
            blocks = 4 * _round_up(b, sub_x) * C * L * it          # x1,x2 double-buffered
            if m_dtype is not None:
                blocks += 2 * _round_up(b, sub_m) * L * m_it
            temps = _round_up(b, 8) * 5 * L * 4                    # live f32 (b,L) temps
            return blocks + temps

        for b in b_candidates:
            if dense_bytes(b) <= budget:
                return "dense", b, L, dense_bytes(b)

    # ---- TILED: (b_tile, C, l_tile) blocks, spatial reduction grid axis ----
    c_pad = _round_up(C, sub_x)                                    # VMEM sublane pad of C

    def tiled_bytes(b, l):
        l_pad = _round_up(l, 128)
        blocks = 4 * b * c_pad * l_pad * it
        if m_dtype is not None:
            blocks += 2 * _round_up(b, sub_m) * l_pad * m_it
        temps = _round_up(b, 8) * 5 * l_pad * 4
        accs = 2 * _round_up(b, 8) * 128 * 4
        return blocks + temps + accs

    # Prefer the full spatial extent per block (one contiguous DMA per sample).
    for b in b_candidates:
        if tiled_bytes(b, L) <= budget:
            return "tiled", b, L, tiled_bytes(b, L)

    # Very large images: tile the flattened spatial axis too.
    b = b_candidates[-1]
    per_lane = 4 * b * c_pad * it + _round_up(b, 8) * 5 * 4
    if m_dtype is not None:
        per_lane += 2 * _round_up(b, sub_m) * m_it
    l = max(128, (budget // max(per_lane, 1)) // 128 * 128)
    l = min(l, _round_up(L, 128))
    return "tiled", b, l, tiled_bytes(b, l)


def _lane_fold(x, width=128, max_unroll=64):
    """Fold (B, L) into a lane-dense (B, width) partial sum with full-vreg adds."""
    bsz, l = x.shape
    if l == width:
        return x
    if l % width == 0 and (l // width) <= max_unroll:
        acc = x[:, :width]
        for g in range(1, l // width):
            acc = acc + x[:, g * width:(g + 1) * width]
        return acc
    # Small / odd tiles: one cross-lane reduce, replicated across lanes
    # (numerator and denominator scale identically, so the ratio is unchanged).
    s = jnp.sum(x, axis=-1, keepdims=True)
    return jnp.broadcast_to(s, (bsz, width))


# ----------------------------- kernel bodies -----------------------------


def _dense_kernel(*refs, C, L, has_mask):
    """x viewed as (b, C*L); full per-sample loss in one grid step."""
    if has_mask:
        x1_ref, x2_ref, m_ref, o_ref = refs
    else:
        x1_ref, x2_ref, o_ref = refs

    sq = None
    fg = None
    for c in range(C):                      # static unroll; lane-aligned slices
        a1 = x1_ref[:, c * L:(c + 1) * L].astype(jnp.float32)
        a2 = x2_ref[:, c * L:(c + 1) * L].astype(jnp.float32)
        d = a1 - a2
        sq = d * d if sq is None else sq + d * d
        if not has_mask:
            f = a1 != -1.0
            fg = f if fg is None else jnp.logical_and(fg, f)

    if has_mask:
        fgf = 1.0 - m_ref[...].astype(jnp.float32)
    else:
        fgf = fg.astype(jnp.float32)

    num = jnp.sum(fgf * sq, axis=-1, keepdims=True)     # (b, 1)
    den = jnp.sum(fgf, axis=-1, keepdims=True)
    o_ref[...] = jnp.broadcast_to(num / den, o_ref.shape)


def _tiled_kernel(*refs, C, L, l_tile, has_mask):
    """x as (b, C, l_tile); spatial reduction accumulated in VMEM scratch."""
    if has_mask:
        x1_ref, x2_ref, m_ref, o_ref, num_acc, den_acc = refs
    else:
        x1_ref, x2_ref, o_ref, num_acc, den_acc = refs

    li = pl.program_id(1)

    @pl.when(li == 0)
    def _():
        num_acc[...] = jnp.zeros_like(num_acc)
        den_acc[...] = jnp.zeros_like(den_acc)

    x1 = x1_ref[...]
    x2 = x2_ref[...]
    sq = None
    fg = None
    for c in range(C):                      # static unroll keeps f32 temps 2-D
        a1 = x1[:, c, :].astype(jnp.float32)
        a2 = x2[:, c, :].astype(jnp.float32)
        d = a1 - a2
        sq = d * d if sq is None else sq + d * d
        if not has_mask:
            f = a1 != -1.0
            fg = f if fg is None else jnp.logical_and(fg, f)

    if has_mask:
        fgf = 1.0 - m_ref[...].astype(jnp.float32)
    else:
        fgf = fg.astype(jnp.float32)

    if L % l_tile != 0:
        # Last spatial block reads past L: zero those lanes (and zero sq too,
        # so garbage NaN/Inf cannot leak through 0 * NaN).
        lane = jax.lax.broadcasted_iota(jnp.int32, fgf.shape, 1)
        valid = (li * l_tile + lane) < L
        fgf = jnp.where(valid, fgf, 0.0)
        sq = jnp.where(valid, sq, 0.0)

    num_acc[...] += _lane_fold(fgf * sq)
    den_acc[...] += _lane_fold(fgf)

    @pl.when(li == pl.num_programs(1) - 1)
    def _():
        num = jnp.sum(num_acc[...], axis=-1, keepdims=True)
        den = jnp.sum(den_acc[...], axis=-1, keepdims=True)
        o_ref[...] = jnp.broadcast_to(num / den, o_ref.shape)


# ------------------------------- wrapper ---------------------------------


def masked_mse_loss(x1, x2, mask=None, *, block_budget_bytes=None):
    """Pallas implementation of MaskedMSELoss.forward; returns a scalar f32."""
    N, C, H, W = x1.shape
    L = H * W

    # Free reshapes (row-major collapse of trailing dims); no padding copies.
    x1f = x1.reshape(N, C, L)
    x2f = x2.reshape(N, C, L)
    mf = None
    m_dtype = None
    if mask is not None:
        mf = mask.reshape(N, L)
        if mf.dtype == jnp.bool_:
            mf = mf.astype(jnp.float32)
        m_dtype = mf.dtype

    budget = (block_budget_bytes if block_budget_bytes is not None
              else _vmem_block_budget_bytes())
    kind, b_tile, l_tile, footprint = _plan(N, C, L, x1.dtype, m_dtype, budget)
    vmem_limit = int(min(max(2 * footprint + (4 << 20), 32 << 20), 48 << 20))

    out_shape = jax.ShapeDtypeStruct((N, 128), jnp.float32)
    has_mask = mf is not None

    if kind == "dense":
        x1d = x1f.reshape(N, C * L)
        x2d = x2f.reshape(N, C * L)
        in_specs = [pl.BlockSpec((b_tile, C * L), lambda g: (g, 0)),
                    pl.BlockSpec((b_tile, C * L), lambda g: (g, 0))]
        args = [x1d, x2d]
        if has_mask:
            in_specs.append(pl.BlockSpec((b_tile, L), lambda g: (g, 0)))
            args.append(mf)
        out = pl.pallas_call(
            functools.partial(_dense_kernel, C=C, L=L, has_mask=has_mask),
            out_shape=out_shape,
            grid_spec=pltpu.PrefetchScalarGridSpec(
                num_scalar_prefetch=0,
                grid=(pl.cdiv(N, b_tile),),
                in_specs=in_specs,
                out_specs=pl.BlockSpec((b_tile, 128), lambda g: (g, 0)),
            ),
            compiler_params=pltpu.CompilerParams(
                dimension_semantics=("parallel",),
                vmem_limit_bytes=vmem_limit),
        )(*args)
    else:
        in_specs = [pl.BlockSpec((b_tile, C, l_tile), lambda g, l: (g, 0, l)),
                    pl.BlockSpec((b_tile, C, l_tile), lambda g, l: (g, 0, l))]
        args = [x1f, x2f]
        if has_mask:
            in_specs.append(pl.BlockSpec((b_tile, l_tile), lambda g, l: (g, l)))
            args.append(mf)
        out = pl.pallas_call(
            functools.partial(_tiled_kernel, C=C, L=L, l_tile=l_tile,
                              has_mask=has_mask),
            out_shape=out_shape,
            grid_spec=pltpu.PrefetchScalarGridSpec(
                num_scalar_prefetch=0,
                grid=(pl.cdiv(N, b_tile), pl.cdiv(L, l_tile)),
                in_specs=in_specs,
                out_specs=pl.BlockSpec((b_tile, 128), lambda g, l: (g, 0)),
                scratch_shapes=[pltpu.VMEM((b_tile, 128), jnp.float32),
                                pltpu.VMEM((b_tile, 128), jnp.float32)],
            ),
            compiler_params=pltpu.CompilerParams(
                dimension_semantics=("parallel", "arbitrary"),
                vmem_limit_bytes=vmem_limit),
        )(*args)

    # Per-sample losses are replicated across the 128 lanes; take lane 0.
    return jnp.mean(out[:, 0])


# ------------------------------ verification ------------------------------


def _reference(x1, x2, mask=None):
    if mask is None:
        fg = jnp.all(x1 != -1.0, axis=1, keepdims=True).astype(jnp.float32)
    else:
        fg = 1.0 - mask
    num = jnp.sum(fg * (x1 - x2) ** 2, axis=(1, 2, 3))
    den = jnp.sum(fg, axis=(1, 2, 3))
    return jnp.mean(num / den)


if __name__ == "__main__":
    key = jax.random.PRNGKey(0)
    ks = jax.random.split(key, 8)

    def run_case(name, N, C, H, W, with_mask, budget=None, key_idx=0):
        k1, k2, k3 = jax.random.split(ks[key_idx], 3)
        x1 = jax.random.normal(k1, (N, C, H, W), dtype=jnp.float32)
        x2 = jax.random.normal(k2, (N, C, H, W), dtype=jnp.float32)
        # deterministic "background" region: all channels == -1
        x1 = x1.at[:, :, : max(1, H // 4), : max(1, W // 2)].set(-1.0)
        mask = None
        if with_mask:
            mask = (jax.random.uniform(k3, (N, 1, H, W)) < 0.25).astype(jnp.float32)
        out = jax.block_until_ready(
            masked_mse_loss(x1, x2, mask, block_budget_bytes=budget))
        ref = _reference(x1, x2, mask)
        assert jnp.allclose(out, ref, rtol=2e-5, atol=1e-5), (name, out, ref)

    # DENSE path (L % 128 == 0, no channel sublane padding, 1-D parallel grid)
    run_case("dense_auto", 2, 3, 16, 16, False, key_idx=0)
    run_case("dense_mask", 2, 3, 16, 16, True, key_idx=1)
    # TILED path, single spatial block (L not 128-aligned)
    run_case("tiled_auto", 3, 3, 10, 20, False, key_idx=2)
    run_case("tiled_mask", 3, 3, 10, 20, True, key_idx=3)
    # TILED path with spatial tail masking + partial batch block (forced budget)
    run_case("tail_auto", 10, 3, 16, 25, False, budget=16 * 1024, key_idx=4)
    run_case("tail_mask", 10, 3, 16, 25, True, budget=16 * 1024, key_idx=5)

    print("KERNEL_OK")
</pallas_src>

<mosaic_0001>
module attributes {stable_mosaic.version = 11 : i64} {
  func.func @_dense_kernel(%arg0: i32, %arg1: memref<2x768xf32, #tpu.memory_space<vmem>>, %arg2: memref<2x768xf32, #tpu.memory_space<vmem>>, %arg3: memref<2x128xf32, #tpu.memory_space<vmem>>) attributes {dimension_semantics = [#tpu.dimension_semantics<parallel>], iteration_bounds = array<i64: 1>, scalar_prefetch = 0 : i64, scratch_operands = 0 : i64, tpu.core_type = #tpu.core_type<tc>, window_params = [{transform_indices = @transform_0, window_bounds = array<i64: 2, 768>}, {transform_indices = @transform_1, window_bounds = array<i64: 2, 768>}, {transform_indices = @transform_2, window_bounds = array<i64: 2, 128>}]} {
    %c0 = arith.constant 0 : index
    %c0_0 = arith.constant 0 : index
    %0 = vector.load %arg1[%c0, %c0_0] : memref<2x768xf32, #tpu.memory_space<vmem>>, vector<2x256xf32>
    %c0_1 = arith.constant 0 : index
    %c0_2 = arith.constant 0 : index
    %1 = vector.load %arg2[%c0_1, %c0_2] : memref<2x768xf32, #tpu.memory_space<vmem>>, vector<2x256xf32>
    %2 = arith.subf %0, %1 : vector<2x256xf32>
    %3 = arith.mulf %2, %2 : vector<2x256xf32>
    %cst = arith.constant -1.000000e+00 : f32
    %4 = vector.broadcast %cst : f32 to vector<2x256xf32>
    %5 = arith.cmpf one, %0, %4 : vector<2x256xf32>
    %c0_3 = arith.constant 0 : index
    %c256 = arith.constant 256 : index
    %6 = vector.load %arg1[%c0_3, %c256] : memref<2x768xf32, #tpu.memory_space<vmem>>, vector<2x256xf32>
    %c0_4 = arith.constant 0 : index
    %c256_5 = arith.constant 256 : index
    %7 = vector.load %arg2[%c0_4, %c256_5] : memref<2x768xf32, #tpu.memory_space<vmem>>, vector<2x256xf32>
    %8 = arith.subf %6, %7 : vector<2x256xf32>
    %9 = arith.mulf %8, %8 : vector<2x256xf32>
    %10 = arith.addf %3, %9 : vector<2x256xf32>
    %cst_6 = arith.constant -1.000000e+00 : f32
    %11 = vector.broadcast %cst_6 : f32 to vector<2x256xf32>
    %12 = arith.cmpf one, %6, %11 : vector<2x256xf32>
    %13 = arith.andi %5, %12 : vector<2x256xi1>
    %c0_7 = arith.constant 0 : index
    %c512 = arith.constant 512 : index
    %14 = vector.load %arg1[%c0_7, %c512] : memref<2x768xf32, #tpu.memory_space<vmem>>, vector<2x256xf32>
    %c0_8 = arith.constant 0 : index
    %c512_9 = arith.constant 512 : index
    %15 = vector.load %arg2[%c0_8, %c512_9] : memref<2x768xf32, #tpu.memory_space<vmem>>, vector<2x256xf32>
    %16 = arith.subf %14, %15 : vector<2x256xf32>
    %17 = arith.mulf %16, %16 : vector<2x256xf32>
    %18 = arith.addf %10, %17 : vector<2x256xf32>
    %cst_10 = arith.constant -1.000000e+00 : f32
    %19 = vector.broadcast %cst_10 : f32 to vector<2x256xf32>
    %20 = arith.cmpf one, %14, %19 : vector<2x256xf32>
    %21 = arith.andi %13, %20 : vector<2x256xi1>
    %22 = arith.extui %21 : vector<2x256xi1> to vector<2x256xi32>
    %23 = arith.sitofp %22 : vector<2x256xi32> to vector<2x256xf32>
    %24 = arith.mulf %23, %18 : vector<2x256xf32>
    %cst_11 = arith.constant dense<0.000000e+00> : vector<2xf32>
    %25 = vector.multi_reduction <add>, %24, %cst_11 [1] : vector<2x256xf32> to vector<2xf32>
    %26 = vector.shape_cast %25 : vector<2xf32> to vector<2x1xf32>
    %cst_12 = arith.constant dense<0.000000e+00> : vector<2xf32>
    %27 = vector.multi_reduction <add>, %23, %cst_12 [1] : vector<2x256xf32> to vector<2xf32>
    %28 = vector.shape_cast %27 : vector<2xf32> to vector<2x1xf32>
    %29 = arith.divf %26, %28 : vector<2x1xf32>
    %30 = vector.shape_cast %29 : vector<2x1xf32> to vector<2x1xf32>
    %31 = vector.broadcast %30 : vector<2x1xf32> to vector<2x128xf32>
    %c0_13 = arith.constant 0 : index
    %c0_14 = arith.constant 0 : index
    %32 = vector.load %arg3[%c0_13, %c0_14] : memref<2x128xf32, #tpu.memory_space<vmem>>, vector<2x128xf32>
    tpu.vector_store %arg3[%c0_13, %c0_14], %31 {strides = array<i32>} : memref<2x128xf32, #tpu.memory_space<vmem>>, vector<2x128xf32>,
    return
  }
  func.func @transform_0(%arg0: i32) -> (i32, i32) {
    %c0_i32 = arith.constant 0 : i32
    %c0_i32_0 = arith.constant 0 : i32
    return %arg0, %c0_i32 : i32, i32
  }
  func.func @transform_1(%arg0: i32) -> (i32, i32) {
    %c0_i32 = arith.constant 0 : i32
    %c0_i32_0 = arith.constant 0 : i32
    return %arg0, %c0_i32 : i32, i32
  }
  func.func @transform_2(%arg0: i32) -> (i32, i32) {
    %c0_i32 = arith.constant 0 : i32
    %c0_i32_0 = arith.constant 0 : i32
    return %arg0, %c0_i32 : i32, i32
  }
}

</mosaic_0001>

<llo_original>
// kernel: tpu_custom_call.1
$region0: #{tpu_custom_call.1}
  #allocation0 [shape = 'u32[]', space=smem, size = 0x4, offset = 0x4, fixed_abs, tag = 'smem constant byte address 0x4 - core index']
  #allocation1 [shape = 'u32[144,128]{1,0:T(1,128)}', space=vmem, size = 0x12000, scoped, tag = 'internal scratch']
  %s0 = inlined_call_operand.hbm [shape: f32[2,768], index: 0, kind: input, shape index: {}]
  %s1 = inlined_call_operand.hbm [shape: f32[2,768], index: 1, kind: input, shape index: {}]
  %s2 = inlined_call_operand.hbm [shape: f32[2,128], index: 2, kind: output, shape index: {}]
  %s3 = sld [smem:[#allocation0]]
  $region26: #{tpu_custom_call.1} parent=0
    _
  %s5 = ssub.s32 1, %s3
  %s6 = scalar_select 0, %s5, %s3
  $region1: #{tpu_custom_call.1} parent=0
    #allocation2 [shape = 'u8[6144]{0}', space=vmem, size = 0x1800, scoped, tag = 'input window, operand 0, single buffered']
    #allocation3 [shape = 's32[1]{0}', space=sflag, size = 0x4, scoped, tag = 'scoped memory for tpu_custom_call.1']
    #allocation4 [shape = 's32[1]{0}', space=sflag, size = 0x4, scoped, tag = 'scoped memory for tpu_custom_call.1']
    #allocation5 [shape = 'u8[6144]{0}', space=vmem, size = 0x1800, scoped, tag = 'input window, operand 1, single buffered']
    #allocation6 [shape = 's32[1]{0}', space=sflag, size = 0x4, scoped, tag = 'scoped memory for tpu_custom_call.1']
    #allocation7 [shape = 'u8[1024]{0}', space=vmem, size = 0x400, scoped, tag = 'output window, operand 0, single buffered']
    %7 = vsyncpa [#allocation3], 0
    %8 = vsyncpa [#allocation6], 0
    %9 = vsyncpa [#allocation4], 0
    // Predicated region
    $region2: #{tpu_custom_call.1} parent=1 // pred_check
      _
    $region3: #{tpu_custom_call.1} parent=1 // pred_check_branch
      %11 = sbr.rel (0) target = $region5
    $region4: #{tpu_custom_call.1} parent=1 // pred_region
      %s13 = ssub.s32 192, 192
      %14 = vsyncadd [#allocation3], %s13
      %s16 = sshll.u32 [#allocation2], 4
      %s17 = int_to_ptr.vmem [resolvable:$true] %s16
      %19 = dma.hbm_to_vmem [thread:$0]  %s0, 192, %s17, [#allocation3]
    $region5: #{tpu_custom_call.1} parent=1 // pred_fallthru
      _
    // Predicated region
    $region6: #{tpu_custom_call.1} parent=1 // pred_check
      _
    $region7: #{tpu_custom_call.1} parent=1 // pred_check_branch
      %21 = sbr.rel (0) target = $region9
    $region8: #{tpu_custom_call.1} parent=1 // pred_region
      %s23 = ssub.s32 192, 192
      %24 = vsyncadd [#allocation6], %s23
      %s26 = sshll.u32 [#allocation5], 4
      %s27 = int_to_ptr.vmem [resolvable:$true] %s26
      %29 = dma.hbm_to_vmem [thread:$0]  %s1, 192, %s27, [#allocation6]
    $region9: #{tpu_custom_call.1} parent=1 // pred_fallthru
      _
    // Predicated region
    $region10: #{tpu_custom_call.1} parent=1 // pred_check
      _
    $region11: #{tpu_custom_call.1} parent=1 // pred_check_branch
      %31 = sbr.rel (0) target = $region13
    $region12: #{tpu_custom_call.1} parent=1 // pred_region
      %32 = dma.done [#allocation3], 192
    $region13: #{tpu_custom_call.1} parent=1 // pred_fallthru
      _
    // Predicated region
    $region14: #{tpu_custom_call.1} parent=1 // pred_check
      _
    $region15: #{tpu_custom_call.1} parent=1 // pred_check_branch
      %34 = sbr.rel (0) target = $region17
    $region16: #{tpu_custom_call.1} parent=1 // pred_region
      %35 = dma.done [#allocation6], 192
    $region17: #{tpu_custom_call.1} parent=1 // pred_fallthru
      _
    %v36 = vld [vmem:[#allocation2] sm:$0xf]
    %v37 = vld [vmem:[#allocation5] sm:$0xf]
    %v38 = vsub.f32 %v36, %v37
    %v39 = vmul.f32 %v38, %v38
    %vm40 = vcmp.ne.f32.partialorder %v36, -1.0
    %v41 = vld [vmem:[#allocation2 + $0x4] sm:$0xf]
    %v42 = vld [vmem:[#allocation5 + $0x4] sm:$0xf]
    %v43 = vsub.f32 %v41, %v42
    %v44 = vmul.f32 %v43, %v43
    %v45 = vadd.f32 %v39, %v44
    %vm46 = vcmp.ne.f32.partialorder %v41, -1.0
    %vm47 = vmand %vm40, %vm46
    %v48 = vld [vmem:[#allocation2 + $0x8] sm:$0xf]
    %v49 = vld [vmem:[#allocation5 + $0x8] sm:$0xf]
    %v50 = vsub.f32 %v48, %v49
    %v51 = vmul.f32 %v50, %v50
    %v52 = vadd.f32 %v45, %v51
    %vm53 = vcmp.ne.f32.partialorder %v48, -1.0
    %vm54 = vmand %vm47, %vm53
    %v55 = vsel %vm54, 1, 0
    %v56 = vcvt.s32.f32 %v55
    %v57 = vmul.f32 %v56, %v52
    %v60 = vunpack.c.l.s4 1983009808
    %v61 = vunpack.c.0.s8 %v60
    %v62 = vlaneseq
    %v63 = vshrl.u32 %v62, 7
    %v64 = vsub.s32 %v61, %v63
    %v65 = vrot.slane %v57, %v64
    %v66 = vcombine.high %v65, %v65
    %vm69 = vcmask 1041408
    %v70 = vsel %vm69, %v65, 0.0
    %v71 = vsel %vm69, %v66, 0.0
    %v72 = vadd.f32 %v70, %v71
    %73 = vadd.xlane.f32.xlu0 %v72
    %v74 = vpop.xlane.xlu0 %73
    %v77 = vunpack.c.l.s4 1983009808
    %v78 = vunpack.c.0.s8 %v77
    %v79 = vlaneseq
    %v80 = vshrl.u32 %v79, 7
    %v81 = vsub.s32 %v78, %v80
    %v82 = vrot.slane %v56, %v81
    %v83 = vcombine.high %v82, %v82
    %v86 = vsel %vm69, %v82, 0.0
    %v87 = vsel %vm69, %v83, 0.0
    %v88 = vadd.f32 %v86, %v87
    %89 = vadd.xlane.f32.xlu0 %v88
    %v90 = vpop.xlane.xlu0 %89
    %v91 = vrcp.pop %v90
    %v92 = vmul.f32 %v74, %v91
    %93 = vst [vmem:[#allocation7] sm:$0x3] %v92
    // Predicated region
    $region18: #{tpu_custom_call.1} parent=1 // pred_check
      _
    $region19: #{tpu_custom_call.1} parent=1 // pred_check_branch
      %95 = sbr.rel (0) target = $region21
    $region20: #{tpu_custom_call.1} parent=1 // pred_region
      %s97 = ssub.s32 32, 32
      %98 = vsyncadd [#allocation4], %s97
      %s100 = sshll.u32 [#allocation7], 4
      %s101 = int_to_ptr.vmem [resolvable:$true] %s100
      %103 = dma.vmem_to_hbm [thread:$0]  %s101, 32, %s2, [#allocation4]
    $region21: #{tpu_custom_call.1} parent=1 // pred_fallthru
      _
    // Predicated region
    $region22: #{tpu_custom_call.1} parent=1 // pred_check
      _
    $region23: #{tpu_custom_call.1} parent=1 // pred_check_branch
      %105 = sbr.rel (0) target = $region25
    $region24: #{tpu_custom_call.1} parent=1 // pred_region
      %106 = dma.done [#allocation4], 32
    $region25: #{tpu_custom_call.1} parent=1 // pred_fallthru
      _
    %107 = vsyncpa [#allocation3], 1
    %108 = vsyncpa [#allocation6], 1
    %109 = vsyncpa [#allocation4], 1

</llo_original>
